<compile_context>
chip_gen: v6e
topology: v6e:2x2x1
jax: 0.10.0
libtpu: 0.0.40
codegen_flags: <defaults>
</compile_context>

<pallas_src>
import numpy as np
import jax
import jax.numpy as jnp
from jax.experimental import pallas as pl
from jax.experimental.pallas import tpu as pltpu

HIDDEN = 64
_LANE = 128
_VMEM_BUDGET = 32 << 20   # safe on v5e/v6e (128 MiB) and v7x (64 MiB physical)


def autoencoder_kernel(xT_ref,
                       w1T_ref, b1_ref,     # encoder Linear(input_dim, 64), transposed
                       w23T_ref, b23_ref,   # folded enc-L2 o dec-L1 == Linear(64, 64), transposed
                       w4T_ref, b4_ref,     # decoder Linear(64, input_dim), transposed
                       outT_ref):
    # Feature-major formulation: activations are (features, TM) with the batch
    # tile TM on the 128-lane axis -> lane-dense VPU work and un-masked stores;
    # every matmul keeps TM on the MXU N axis and accumulates in f32.
    xT = xT_ref[...]                                                    # (in_dim, TM)

    h1 = jnp.dot(w1T_ref[...], xT, preferred_element_type=jnp.float32)
    h1 = jnp.maximum(h1 + b1_ref[...], 0.0)                             # (64, TM) f32

    h2 = jnp.dot(w23T_ref[...], h1.astype(w23T_ref.dtype),
                 preferred_element_type=jnp.float32)
    h2 = jnp.maximum(h2 + b23_ref[...], 0.0)                            # (64, TM) f32

    y = jnp.dot(w4T_ref[...], h2.astype(w4T_ref.dtype),
                preferred_element_type=jnp.float32)
    outT_ref[...] = (y + b4_ref[...]).astype(outT_ref.dtype)            # (in_dim, TM)


def _pick_tile(batch, input_dim, in_itemsize, out_itemsize, target_steps):
    """Batch-tile (lane) size: as large as possible under the VMEM budget,
    but >= target_steps grid steps so v7x's two TensorCores both get work."""
    if batch <= 2 * _LANE:
        # Block equal to the full array dim is exempt from the 128-multiple rule.
        return batch
    # Per-column VMEM: double-buffered x/out blocks + two f32 (64, TM) intermediates.
    per_col = 2 * input_dim * (in_itemsize + out_itemsize) + 2 * HIDDEN * 4
    cap = max(_LANE, ((_VMEM_BUDGET // 2) // per_col) // _LANE * _LANE)
    tm = -(-batch // target_steps)            # cdiv
    tm = -(-tm // _LANE) * _LANE              # round up to a lane multiple
    return min(tm, cap)


def autoencoder_forward(x, params, *, compute_dtype=jnp.bfloat16, target_steps=2):
    """Autoencoder forward. x: (batch, input_dim) float32 -> (batch, input_dim) float32.

    compute_dtype: dtype used to stream x / weights through the MXU (bias-add,
      ReLU and accumulation stay f32).  Use jnp.float32 for bit-conservative
      Linear numerics.
    target_steps: minimum grid steps (>=2 lets the two v7x TensorCores split
      the batch; an extra step is noise on single-TC v5e/v6e).
    """
    batch, input_dim = x.shape
    f32 = jnp.float32

    # ---- wrapper-side algebra & layout (plain XLA, outside the kernel) ----
    # Latent fold: no nonlinearity between encoder's last Linear and decoder's
    # first Linear, so (h@w2 + b2)@w3 + b3 == h@(w2@w3) + (b2@w3 + b3).
    w23 = params["w2"].astype(f32) @ params["w3"].astype(f32)                    # (64, 64)
    b23 = params["b2"].astype(f32) @ params["w3"].astype(f32) + params["b3"].astype(f32)

    # Feature-major (transposed) operands so batch maps to the lane axis.
    xT = x.T.astype(compute_dtype)                                               # (in_dim, batch)
    w1T = params["w1"].T.astype(compute_dtype)                                   # (64, in_dim)
    w23T = w23.T.astype(compute_dtype)                                           # (64, 64)
    w4T = params["w4"].T.astype(compute_dtype)                                   # (in_dim, 64)
    b1T = params["b1"].T.astype(f32)                                             # (64, 1)
    b23T = b23.T.astype(f32)                                                     # (64, 1)
    b4T = params["b4"].T.astype(f32)                                             # (in_dim, 1)

    in_itemsize = np.dtype(compute_dtype).itemsize
    tm = _pick_tile(batch, input_dim, in_itemsize, 4, target_steps)
    # No pad / output slice: a partial last block is read-padded / write-masked
    # by Pallas; each batch column is independent so padding never leaks.
    grid = (pl.cdiv(batch, tm),)

    consts = (w1T, b1T, w23T, b23T, w4T, b4T)
    in_specs = [pl.BlockSpec((input_dim, tm), lambda i: (0, i))]
    # Weights/biases: full block, constant index -> VMEM-resident across steps.
    in_specs += [pl.BlockSpec(c.shape, lambda i: (0, 0)) for c in consts]

    flops = 2 * batch * (input_dim * HIDDEN + HIDDEN * HIDDEN + HIDDEN * input_dim)
    weight_bytes = sum(int(c.size) * c.dtype.itemsize for c in consts)
    bytes_accessed = batch * input_dim * (in_itemsize + 4) + weight_bytes

    outT = pl.pallas_call(
        autoencoder_kernel,
        out_shape=jax.ShapeDtypeStruct((input_dim, batch), f32),
        grid=grid,
        in_specs=in_specs,
        out_specs=pl.BlockSpec((input_dim, tm), lambda i: (0, i)),
        compiler_params=pltpu.CompilerParams(
            dimension_semantics=("parallel",),
            vmem_limit_bytes=_VMEM_BUDGET,
        ),
        cost_estimate=pl.CostEstimate(
            flops=int(flops), transcendentals=0, bytes_accessed=int(bytes_accessed)),
    )(xT, *consts)

    # Back to the module's (batch, input_dim) layout (pure XLA; callers that
    # already hold feature-major activations can consume outT directly).
    return outT.T


def init_params(input_dim, latent_dim, hidden=HIDDEN, seed=0):
    """Deterministic synthetic parameters (PyTorch-equivalent init, stored
    transposed as (in, out) so y = x @ W + b)."""
    key = jax.random.PRNGKey(seed)
    ks = jax.random.split(key, 8)

    def lin(kw, kb, fan_in, fan_out):
        bound = 1.0 / jnp.sqrt(fan_in)
        w = jax.random.uniform(kw, (fan_in, fan_out), jnp.float32, -bound, bound)
        b = jax.random.uniform(kb, (1, fan_out), jnp.float32, -bound, bound)
        return w, b

    w1, b1 = lin(ks[0], ks[1], input_dim, hidden)     # Linear(input_dim, 64)
    w2, b2 = lin(ks[2], ks[3], hidden, latent_dim)    # Linear(64, latent_dim)
    w3, b3 = lin(ks[4], ks[5], latent_dim, hidden)    # Linear(latent_dim, 64)
    w4, b4 = lin(ks[6], ks[7], hidden, input_dim)     # Linear(64, input_dim)
    return dict(w1=w1, b1=b1, w2=w2, b2=b2, w3=w3, b3=b3, w4=w4, b4=b4)


def autoencoder_ref(x, p):
    """Pure-JAX reference (unfolded; matches the PyTorch forward exactly)."""
    h = jnp.maximum(x @ p["w1"] + p["b1"], 0.0)
    z = h @ p["w2"] + p["b2"]
    h = jnp.maximum(z @ p["w3"] + p["b3"], 0.0)
    return h @ p["w4"] + p["b4"]


if __name__ == "__main__":
    batch = 1024          # -> tm=512, grid=2 (both v7x TensorCores get a "parallel" step)
    input_dim = 16        # X_tensor.shape[1] in the original script (synthetic here)
    latent_dim = 2

    x = jax.random.normal(jax.random.PRNGKey(0), (batch, input_dim), dtype=jnp.float32)
    params = init_params(input_dim, latent_dim, seed=0)
    ref = autoencoder_ref(x, params)

    # Bit-conservative path: f32 streaming (only the W23 fold reassociates the
    # tiny latent-dim contraction).
    out_f32 = jax.block_until_ready(
        autoencoder_forward(x, params, compute_dtype=jnp.float32))
    assert out_f32.shape == (batch, input_dim)
    assert jnp.allclose(out_f32, ref, atol=2e-3, rtol=2e-3), "f32 path mismatch vs reference"

    # Default performance path: bf16 streaming, f32 accumulation.
    out_bf16 = jax.block_until_ready(autoencoder_forward(x, params))
    assert out_bf16.shape == (batch, input_dim)
    assert jnp.allclose(out_bf16, ref, atol=8e-2, rtol=8e-2), "bf16 path mismatch vs reference"

    print("KERNEL_OK")
</pallas_src>

<mosaic_0001>
module attributes {stable_mosaic.version = 11 : i64} {
  func.func @autoencoder_kernel(%arg0: i32, %arg1: memref<16x512xf32, #tpu.memory_space<vmem>>, %arg2: memref<64x16xf32, #tpu.memory_space<vmem>>, %arg3: memref<64x1xf32, #tpu.memory_space<vmem>>, %arg4: memref<64x64xf32, #tpu.memory_space<vmem>>, %arg5: memref<64x1xf32, #tpu.memory_space<vmem>>, %arg6: memref<16x64xf32, #tpu.memory_space<vmem>>, %arg7: memref<16x1xf32, #tpu.memory_space<vmem>>, %arg8: memref<16x512xf32, #tpu.memory_space<vmem>>) attributes {dimension_semantics = [#tpu.dimension_semantics<parallel>], iteration_bounds = array<i64: 2>, scalar_prefetch = 0 : i64, scratch_operands = 0 : i64, tpu.core_type = #tpu.core_type<tc>, window_params = [{transform_indices = @transform_0, window_bounds = array<i64: 16, 512>}, {pipeline_mode = #tpu.pipeline_mode<synchronous>, transform_indices = @transform_1, window_bounds = array<i64: 64, 16>}, {pipeline_mode = #tpu.pipeline_mode<synchronous>, transform_indices = @transform_2, window_bounds = array<i64: 64, 1>}, {pipeline_mode = #tpu.pipeline_mode<synchronous>, transform_indices = @transform_3, window_bounds = array<i64: 64, 64>}, {pipeline_mode = #tpu.pipeline_mode<synchronous>, transform_indices = @transform_4, window_bounds = array<i64: 64, 1>}, {pipeline_mode = #tpu.pipeline_mode<synchronous>, transform_indices = @transform_5, window_bounds = array<i64: 16, 64>}, {pipeline_mode = #tpu.pipeline_mode<synchronous>, transform_indices = @transform_6, window_bounds = array<i64: 16, 1>}, {transform_indices = @transform_7, window_bounds = array<i64: 16, 512>}]} {
    %c0 = arith.constant 0 : index
    %c0_0 = arith.constant 0 : index
    %0 = vector.load %arg1[%c0, %c0_0] : memref<16x512xf32, #tpu.memory_space<vmem>>, vector<16x512xf32>
    %c0_1 = arith.constant 0 : index
    %c0_2 = arith.constant 0 : index
    %1 = vector.load %arg2[%c0_1, %c0_2] : memref<64x16xf32, #tpu.memory_space<vmem>>, vector<64x16xf32>
    %cst = arith.constant dense<0.000000e+00> : vector<64x512xf32>
    %2 = tpu.matmul %1, %0, %cst {dimension_numbers = #tpu.dot_dimension_numbers<[1], [0], [0], [1], [0, 0, 1, 1], [], []>} : vector<64x16xf32>, vector<16x512xf32>, vector<64x512xf32> -> vector<64x512xf32>
    %c0_3 = arith.constant 0 : index
    %c0_4 = arith.constant 0 : index
    %3 = vector.load %arg3[%c0_3, %c0_4] : memref<64x1xf32, #tpu.memory_space<vmem>>, vector<64x1xf32>
    %4 = vector.broadcast %3 : vector<64x1xf32> to vector<64x512xf32>
    %5 = arith.addf %2, %4 : vector<64x512xf32>
    %cst_5 = arith.constant 0.000000e+00 : f32
    %6 = vector.broadcast %cst_5 : f32 to vector<64x512xf32>
    %7 = arith.maximumf %5, %6 : vector<64x512xf32>
    %c0_6 = arith.constant 0 : index
    %c0_7 = arith.constant 0 : index
    %8 = vector.load %arg4[%c0_6, %c0_7] : memref<64x64xf32, #tpu.memory_space<vmem>>, vector<64x64xf32>
    %cst_8 = arith.constant dense<0.000000e+00> : vector<64x512xf32>
    %9 = tpu.matmul %8, %7, %cst_8 {dimension_numbers = #tpu.dot_dimension_numbers<[1], [0], [0], [1], [0, 0, 1, 1], [], []>} : vector<64x64xf32>, vector<64x512xf32>, vector<64x512xf32> -> vector<64x512xf32>
    %c0_9 = arith.constant 0 : index
    %c0_10 = arith.constant 0 : index
    %10 = vector.load %arg5[%c0_9, %c0_10] : memref<64x1xf32, #tpu.memory_space<vmem>>, vector<64x1xf32>
    %11 = vector.broadcast %10 : vector<64x1xf32> to vector<64x512xf32>
    %12 = arith.addf %9, %11 : vector<64x512xf32>
    %cst_11 = arith.constant 0.000000e+00 : f32
    %13 = vector.broadcast %cst_11 : f32 to vector<64x512xf32>
    %14 = arith.maximumf %12, %13 : vector<64x512xf32>
    %c0_12 = arith.constant 0 : index
    %c0_13 = arith.constant 0 : index
    %15 = vector.load %arg6[%c0_12, %c0_13] : memref<16x64xf32, #tpu.memory_space<vmem>>, vector<16x64xf32>
    %cst_14 = arith.constant dense<0.000000e+00> : vector<16x512xf32>
    %16 = tpu.matmul %15, %14, %cst_14 {dimension_numbers = #tpu.dot_dimension_numbers<[1], [0], [0], [1], [0, 0, 1, 1], [], []>} : vector<16x64xf32>, vector<64x512xf32>, vector<16x512xf32> -> vector<16x512xf32>
    %c0_15 = arith.constant 0 : index
    %c0_16 = arith.constant 0 : index
    %17 = vector.load %arg7[%c0_15, %c0_16] : memref<16x1xf32, #tpu.memory_space<vmem>>, vector<16x1xf32>
    %18 = vector.broadcast %17 : vector<16x1xf32> to vector<16x512xf32>
    %19 = arith.addf %16, %18 : vector<16x512xf32>
    %c0_17 = arith.constant 0 : index
    %c0_18 = arith.constant 0 : index
    %20 = vector.load %arg8[%c0_17, %c0_18] : memref<16x512xf32, #tpu.memory_space<vmem>>, vector<16x512xf32>
    tpu.vector_store %arg8[%c0_17, %c0_18], %19 {strides = array<i32>} : memref<16x512xf32, #tpu.memory_space<vmem>>, vector<16x512xf32>,
    return
  }
  func.func @transform_0(%arg0: i32) -> (i32, i32) {
    %c0_i32 = arith.constant 0 : i32
    %c0_i32_0 = arith.constant 0 : i32
    return %c0_i32, %arg0 : i32, i32
  }
  func.func @transform_1(%arg0: i32) -> (i32, i32) {
    %c0_i32 = arith.constant 0 : i32
    %c0_i32_0 = arith.constant 0 : i32
    %c0_i32_1 = arith.constant 0 : i32
    return %c0_i32, %c0_i32_0 : i32, i32
  }
  func.func @transform_2(%arg0: i32) -> (i32, i32) {
    %c0_i32 = arith.constant 0 : i32
    %c0_i32_0 = arith.constant 0 : i32
    %c0_i32_1 = arith.constant 0 : i32
    return %c0_i32, %c0_i32_0 : i32, i32
  }
  func.func @transform_3(%arg0: i32) -> (i32, i32) {
    %c0_i32 = arith.constant 0 : i32
    %c0_i32_0 = arith.constant 0 : i32
    %c0_i32_1 = arith.constant 0 : i32
    return %c0_i32, %c0_i32_0 : i32, i32
  }
  func.func @transform_4(%arg0: i32) -> (i32, i32) {
    %c0_i32 = arith.constant 0 : i32
    %c0_i32_0 = arith.constant 0 : i32
    %c0_i32_1 = arith.constant 0 : i32
    return %c0_i32, %c0_i32_0 : i32, i32
  }
  func.func @transform_5(%arg0: i32) -> (i32, i32) {
    %c0_i32 = arith.constant 0 : i32
    %c0_i32_0 = arith.constant 0 : i32
    %c0_i32_1 = arith.constant 0 : i32
    return %c0_i32, %c0_i32_0 : i32, i32
  }
  func.func @transform_6(%arg0: i32) -> (i32, i32) {
    %c0_i32 = arith.constant 0 : i32
    %c0_i32_0 = arith.constant 0 : i32
    %c0_i32_1 = arith.constant 0 : i32
    return %c0_i32, %c0_i32_0 : i32, i32
  }
  func.func @transform_7(%arg0: i32) -> (i32, i32) {
    %c0_i32 = arith.constant 0 : i32
    %c0_i32_0 = arith.constant 0 : i32
    return %c0_i32, %arg0 : i32, i32
  }
}

</mosaic_0001>

<llo_original>
// kernel: tpu_custom_call.1
$region0: #{tpu_custom_call.1}
  #allocation0 [shape = 'u32[]', space=smem, size = 0x4, offset = 0x4, fixed_abs, tag = 'smem constant byte address 0x4 - core index']
  #allocation1 [shape = 'u32[144,128]{1,0:T(1,128)}', space=vmem, size = 0x12000, scoped, tag = 'internal scratch']
  %s0 = inlined_call_operand.vmem [shape: f32[16,1024], index: 0, kind: input, shape index: {}]
  %s1 = inlined_call_operand.vmem [shape: f32[64,16], index: 1, kind: input, shape index: {}]
  %s2 = inlined_call_operand.vmem [shape: f32[64,1], index: 2, kind: input, shape index: {}]
  %s3 = inlined_call_operand.vmem [shape: f32[64,64], index: 3, kind: input, shape index: {}]
  %s4 = inlined_call_operand.vmem [shape: f32[64,1], index: 4, kind: input, shape index: {}]
  %s5 = inlined_call_operand.vmem [shape: f32[16,64], index: 5, kind: input, shape index: {}]
  %s6 = inlined_call_operand.vmem [shape: f32[16,1], index: 6, kind: input, shape index: {}]
  %s7 = inlined_call_operand.hbm [shape: f32[16,1024], index: 7, kind: output, shape index: {}]
  %s8 = sld [smem:[#allocation0]]
  $region84: #{tpu_custom_call.1} parent=0
    _
  %s10 = ssub.s32 1, %s8
  %s11 = scalar_select 0, %s10, %s8
  $region1: #{tpu_custom_call.1} parent=0
    #allocation2 [shape = 'u8[65536]{0}', space=vmem, size = 0x10000, scoped, tag = 'input window, operand 0']
    #allocation3 [shape = 'u8[65536]{0}', space=vmem, size = 0x10000, scoped, tag = 'output window, operand 0']
    #allocation4 [shape = 's32[2]{0}', space=sflag, size = 0x8, scoped, tag = 'scoped memory for tpu_custom_call.1']
    %12 = vsyncpa [#allocation4], 0
    %s13 = scalar_lea.sflag [#allocation4], 1
    %14 = vsyncpa %s13, 0
    loop: start=0, step=1, limit=4
    $region2: #{tpu_custom_call.1} parent=1 // loop_pre_header
      _
    $region3: #{tpu_custom_call.1} parent=1 // loop_header
      %s16 = sphi 0, %s20
      %p17 = scmp.ge.s32.totalorder %s16, 4
      %s26 = sphi 0, %s28
      %s29 = sphi 0, %s26
      %s30 = sphi 0, %s29
      %s46 = sphi 0, %s30
      %s50 = sphi 0, %s50
      %s52 = sphi 0, %s50
      %s53 = sphi 0, %s52
      %s67 = sphi 0, %s53
      %s71 = sphi 0, %s71
      %s73 = sphi 0, %s71
      %s74 = sphi 0, %s73
      %s88 = sphi 0, %s74
      %s92 = sphi 0, %s92
      %s94 = sphi 0, %s92
      %s95 = sphi 0, %s94
      %s109 = sphi 0, %s95
      %s113 = sphi 0, %s113
      %s115 = sphi 0, %s113
      %s116 = sphi 0, %s115
      %s130 = sphi 0, %s116
      %s134 = sphi 0, %s134
      %s136 = sphi 0, %s134
      %s137 = sphi 0, %s136
      %s151 = sphi 0, %s137
      %s155 = sphi 0, %s155
      %s157 = sphi 0, %s155
      %s158 = sphi 0, %s157
      %s172 = sphi 0, %s158
      %s178 = sphi 0, %s180
      %s181 = sphi 0, %s178
      %s182 = sphi 0, %s181
      %s198 = sphi 0, %s182
    $region4: #{tpu_custom_call.1} parent=1 // loop_header_branch
      %19 = sbr.rel (%p17) target = $region8
    $region5: #{tpu_custom_call.1} parent=1 // loop_body
      %s21 = ssub.s32 %s16, 1
      %s22 = ssub.s32 %s16, 2
      %s23 = sadd.s32 %s16, 1
      %s24 = ssub.s32 %s16, %s23
      %p25 = scmp.eq.s32.totalorder %s24, 0
      %s27 = sadd.s32 %s26, 1
      %s28 = scalar_select %p25, %s26, %s27
      %p31 = pneg %p25
      %p32 = scmp.eq.s32.totalorder %s16, 1
      %p33 = por %p31, %p32
      %p34 = scmp.ne.s32.totalorder %s26, %s29
      %p35 = scmp.eq.s32.totalorder %s16, 0
      %p36 = por %p34, %p35
      %p37 = scmp.ne.s32.totalorder %s26, %s29
      %p38 = scmp.eq.s32.totalorder %s21, 1
      %p39 = por %p37, %p38
      %p40 = scmp.ne.s32.totalorder %s29, %s30
      %p41 = scmp.eq.s32.totalorder %s21, 0
      %p42 = por %p40, %p41
      %p43 = scmp.ne.s32.totalorder %s29, %s30
      %p44 = scmp.eq.s32.totalorder %s22, 1
      %p45 = por %p43, %p44
      %p47 = scmp.ne.s32.totalorder %s30, %s46
      %p48 = scmp.eq.s32.totalorder %s22, 0
      %p49 = por %p47, %p48
      %s51 = sadd.s32 %s50, 1
      %p54 = scmp.eq.s32.totalorder %s16, 1
      %p55 = scmp.ne.s32.totalorder %s50, %s52
      %p56 = scmp.eq.s32.totalorder %s16, 0
      %p57 = por %p55, %p56
      %p58 = scmp.ne.s32.totalorder %s50, %s52
      %p59 = scmp.eq.s32.totalorder %s21, 1
      %p60 = por %p58, %p59
      %p61 = scmp.ne.s32.totalorder %s52, %s53
      %p62 = scmp.eq.s32.totalorder %s21, 0
      %p63 = por %p61, %p62
      %p64 = scmp.ne.s32.totalorder %s52, %s53
      %p65 = scmp.eq.s32.totalorder %s22, 1
      %p66 = por %p64, %p65
      %p68 = scmp.ne.s32.totalorder %s53, %s67
      %p69 = scmp.eq.s32.totalorder %s22, 0
      %p70 = por %p68, %p69
      %s72 = sadd.s32 %s71, 1
      %p75 = scmp.eq.s32.totalorder %s16, 1
      %p76 = scmp.ne.s32.totalorder %s71, %s73
      %p77 = scmp.eq.s32.totalorder %s16, 0
      %p78 = por %p76, %p77
      %p79 = scmp.ne.s32.totalorder %s71, %s73
      %p80 = scmp.eq.s32.totalorder %s21, 1
      %p81 = por %p79, %p80
      %p82 = scmp.ne.s32.totalorder %s73, %s74
      %p83 = scmp.eq.s32.totalorder %s21, 0
      %p84 = por %p82, %p83
      %p85 = scmp.ne.s32.totalorder %s73, %s74
      %p86 = scmp.eq.s32.totalorder %s22, 1
      %p87 = por %p85, %p86
      %p89 = scmp.ne.s32.totalorder %s74, %s88
      %p90 = scmp.eq.s32.totalorder %s22, 0
      %p91 = por %p89, %p90
      %s93 = sadd.s32 %s92, 1
      %p96 = scmp.eq.s32.totalorder %s16, 1
      %p97 = scmp.ne.s32.totalorder %s92, %s94
      %p98 = scmp.eq.s32.totalorder %s16, 0
      %p99 = por %p97, %p98
      %p100 = scmp.ne.s32.totalorder %s92, %s94
      %p101 = scmp.eq.s32.totalorder %s21, 1
      %p102 = por %p100, %p101
      %p103 = scmp.ne.s32.totalorder %s94, %s95
      %p104 = scmp.eq.s32.totalorder %s21, 0
      %p105 = por %p103, %p104
      %p106 = scmp.ne.s32.totalorder %s94, %s95
      %p107 = scmp.eq.s32.totalorder %s22, 1
      %p108 = por %p106, %p107
      %p110 = scmp.ne.s32.totalorder %s95, %s109
      %p111 = scmp.eq.s32.totalorder %s22, 0
      %p112 = por %p110, %p111
      %s114 = sadd.s32 %s113, 1
      %p117 = scmp.eq.s32.totalorder %s16, 1
      %p118 = scmp.ne.s32.totalorder %s113, %s115
      %p119 = scmp.eq.s32.totalorder %s16, 0
      %p120 = por %p118, %p119
      %p121 = scmp.ne.s32.totalorder %s113, %s115
      %p122 = scmp.eq.s32.totalorder %s21, 1
      %p123 = por %p121, %p122
      %p124 = scmp.ne.s32.totalorder %s115, %s116
      %p125 = scmp.eq.s32.totalorder %s21, 0
      %p126 = por %p124, %p125
      %p127 = scmp.ne.s32.totalorder %s115, %s116
      %p128 = scmp.eq.s32.totalorder %s22, 1
      %p129 = por %p127, %p128
      %p131 = scmp.ne.s32.totalorder %s116, %s130
      %p132 = scmp.eq.s32.totalorder %s22, 0
      %p133 = por %p131, %p132
      %s135 = sadd.s32 %s134, 1
      %p138 = scmp.eq.s32.totalorder %s16, 1
      %p139 = scmp.ne.s32.totalorder %s134, %s136
      %p140 = scmp.eq.s32.totalorder %s16, 0
      %p141 = por %p139, %p140
      %p142 = scmp.ne.s32.totalorder %s134, %s136
      %p143 = scmp.eq.s32.totalorder %s21, 1
      %p144 = por %p142, %p143
      %p145 = scmp.ne.s32.totalorder %s136, %s137
      %p146 = scmp.eq.s32.totalorder %s21, 0
      %p147 = por %p145, %p146
      %p148 = scmp.ne.s32.totalorder %s136, %s137
      %p149 = scmp.eq.s32.totalorder %s22, 1
      %p150 = por %p148, %p149
      %p152 = scmp.ne.s32.totalorder %s137, %s151
      %p153 = scmp.eq.s32.totalorder %s22, 0
      %p154 = por %p152, %p153
      %s156 = sadd.s32 %s155, 1
      %p159 = scmp.eq.s32.totalorder %s16, 1
      %p160 = scmp.ne.s32.totalorder %s155, %s157
      %p161 = scmp.eq.s32.totalorder %s16, 0
      %p162 = por %p160, %p161
      %p163 = scmp.ne.s32.totalorder %s155, %s157
      %p164 = scmp.eq.s32.totalorder %s21, 1
      %p165 = por %p163, %p164
      %p166 = scmp.ne.s32.totalorder %s157, %s158
      %p167 = scmp.eq.s32.totalorder %s21, 0
      %p168 = por %p166, %p167
      %p169 = scmp.ne.s32.totalorder %s157, %s158
      %p170 = scmp.eq.s32.totalorder %s22, 1
      %p171 = por %p169, %p170
      %p173 = scmp.ne.s32.totalorder %s158, %s172
      %p174 = scmp.eq.s32.totalorder %s22, 0
      %p175 = por %p173, %p174
      %s176 = ssub.s32 %s16, %s23
      %p177 = scmp.eq.s32.totalorder %s176, 0
      %s179 = sadd.s32 %s178, 1
      %s180 = scalar_select %p177, %s178, %s179
      %p183 = pneg %p177
      %p184 = scmp.eq.s32.totalorder %s16, 1
      %p185 = por %p183, %p184
      %p186 = scmp.ne.s32.totalorder %s178, %s181
      %p187 = scmp.eq.s32.totalorder %s16, 0
      %p188 = por %p186, %p187
      %p189 = scmp.ne.s32.totalorder %s178, %s181
      %p190 = scmp.eq.s32.totalorder %s21, 1
      %p191 = por %p189, %p190
      %p192 = scmp.ne.s32.totalorder %s181, %s182
      %p193 = scmp.eq.s32.totalorder %s21, 0
      %p194 = por %p192, %p193
      %p195 = scmp.ne.s32.totalorder %s181, %s182
      %p196 = scmp.eq.s32.totalorder %s22, 1
      %p197 = por %p195, %p196
      %p199 = scmp.ne.s32.totalorder %s182, %s198
      %p200 = scmp.eq.s32.totalorder %s22, 0
      %p201 = por %p199, %p200
      %p202 = scmp.le.s32.totalorder 1, %s16
      %p203 = scmp.lt.s32.totalorder %s16, 3
      %p204 = pnand %p202, %p203
      %p205 = pneg %p204
      // Predicated region
      $region9: #{tpu_custom_call.1} parent=5 // pred_check
        _
      $region10: #{tpu_custom_call.1} parent=5 // pred_check_branch
        %207 = sbr.rel (%p204) target = $region12
      $region11: #{tpu_custom_call.1} parent=5 // pred_region
        %s208 = ssub.s32 %s16, 1
        // Predicated region
        $region13: #{tpu_custom_call.1} parent=11 // pred_check
          %p209 = pneg %p63
        $region14: #{tpu_custom_call.1} parent=11 // pred_check_branch
          %211 = sbr.rel (%p209) target = $region16
        $region15: #{tpu_custom_call.1} parent=11 // pred_region
          _
        $region16: #{tpu_custom_call.1} parent=11 // pred_fallthru
          _
        // Predicated region
        $region17: #{tpu_custom_call.1} parent=11 // pred_check
          %p212 = pneg %p84
        $region18: #{tpu_custom_call.1} parent=11 // pred_check_branch
          %214 = sbr.rel (%p212) target = $region20
        $region19: #{tpu_custom_call.1} parent=11 // pred_region
          _
        $region20: #{tpu_custom_call.1} parent=11 // pred_fallthru
          _
        // Predicated region
        $region21: #{tpu_custom_call.1} parent=11 // pred_check
          %p215 = pneg %p105
        $region22: #{tpu_custom_call.1} parent=11 // pred_check_branch
          %217 = sbr.rel (%p215) target = $region24
        $region23: #{tpu_custom_call.1} parent=11 // pred_region
          _
        $region24: #{tpu_custom_call.1} parent=11 // pred_fallthru
          _
        // Predicated region
        $region25: #{tpu_custom_call.1} parent=11 // pred_check
          %p218 = pneg %p126
        $region26: #{tpu_custom_call.1} parent=11 // pred_check_branch
          %220 = sbr.rel (%p218) target = $region28
        $region27: #{tpu_custom_call.1} parent=11 // pred_region
          _
        $region28: #{tpu_custom_call.1} parent=11 // pred_fallthru
          _
        // Predicated region
        $region29: #{tpu_custom_call.1} parent=11 // pred_check
          %p221 = pneg %p147
        $region30: #{tpu_custom_call.1} parent=11 // pred_check_branch
          %223 = sbr.rel (%p221) target = $region32
        $region31: #{tpu_custom_call.1} parent=11 // pred_region
          _
        $region32: #{tpu_custom_call.1} parent=11 // pred_fallthru
          _
        // Predicated region
        $region33: #{tpu_custom_call.1} parent=11 // pred_check
          %p224 = pneg %p168
        $region34: #{tpu_custom_call.1} parent=11 // pred_check_branch
          %226 = sbr.rel (%p224) target = $region36
        $region35: #{tpu_custom_call.1} parent=11 // pred_region
          _
        $region36: #{tpu_custom_call.1} parent=11 // pred_fallthru
          _
      $region12: #{tpu_custom_call.1} parent=5 // pred_fallthru
        _
      %p227 = scmp.lt.s32.totalorder %s16, 2
      // Predicated region
      $region37: #{tpu_custom_call.1} parent=5 // pred_check
        %p228 = pneg %p227
      $region38: #{tpu_custom_call.1} parent=5 // pred_check_branch
        %230 = sbr.rel (%p228) target = $region40
      $region39: #{tpu_custom_call.1} parent=5 // pred_region
        // Predicated region
        $region41: #{tpu_custom_call.1} parent=39 // pred_check
          %p231 = pneg %p36
        $region42: #{tpu_custom_call.1} parent=39 // pred_check_branch
          %233 = sbr.rel (%p231) target = $region44
        $region43: #{tpu_custom_call.1} parent=39 // pred_region
          %s234 = sand.u32 %s26, 1
          %s235 = sand.u32 %s26, 1
          %s236 = smul.addr %s235, 64
          %s237 = scalar_lea.vmem [#allocation2], %s236
          %s238 = smul.u32 4, %s16
          %s239 = smul.addr %s238, 8
          %s240 = scalar_lea.vmem %s0, %s239
          // Predicated region
          $region45: #{tpu_custom_call.1} parent=43 // pred_check
            _
          $region46: #{tpu_custom_call.1} parent=43 // pred_check_branch
            %242 = sbr.rel (0) target = $region48
          $region47: #{tpu_custom_call.1} parent=43 // pred_region
            // Predicated region
            $region49: #{tpu_custom_call.1} parent=47 // pred_check
              _
            $region50: #{tpu_custom_call.1} parent=47 // pred_check_branch
              %244 = sbr.rel (0) target = $region52
            $region51: #{tpu_custom_call.1} parent=47 // pred_region
              loop: start=0, step=1, limit=1
              $region53: #{tpu_custom_call.1} parent=51 // loop_pre_header
                _
              $region54: #{tpu_custom_call.1} parent=51 // loop_header
                %s246 = sphi 0, %s250
                %p247 = scmp.ge.s32.totalorder %s246, 1
                %s251 = sphi %s240, %s240
                %s252 = sphi %s237, %s237
              $region55: #{tpu_custom_call.1} parent=51 // loop_header_branch
                %249 = sbr.rel (%p247) target = $region59
              $region56: #{tpu_custom_call.1} parent=51 // loop_body
                %v253 = vld [vmem:[%s251] sm:$0xff]
                %254 = vst [vmem:[%s252] sm:$0xff] %v253
                %v255 = vld [vmem:[%s251 + $0x8] sm:$0xff]
                %256 = vst [vmem:[%s252 + $0x8] sm:$0xff] %v255
                %v257 = vld [vmem:[%s251 + $0x10] sm:$0xff]
                %258 = vst [vmem:[%s252 + $0x10] sm:$0xff] %v257
                %v259 = vld [vmem:[%s251 + $0x18] sm:$0xff]
                %260 = vst [vmem:[%s252 + $0x18] sm:$0xff] %v259
                %v261 = vld [vmem:[%s251 + $0x40] sm:$0xff]
                %262 = vst [vmem:[%s252 + $0x20] sm:$0xff] %v261
                %v263 = vld [vmem:[%s251 + $0x48] sm:$0xff]
                %264 = vst [vmem:[%s252 + $0x28] sm:$0xff] %v263
                %v265 = vld [vmem:[%s251 + $0x50] sm:$0xff]
                %266 = vst [vmem:[%s252 + $0x30] sm:$0xff] %v265
                %v267 = vld [vmem:[%s251 + $0x58] sm:$0xff]
                %268 = vst [vmem:[%s252 + $0x38] sm:$0xff] %v267
              $region57: #{tpu_custom_call.1} parent=51 // loop_footer
                %s250 = sadd.s32 1, %s246
              $region58: #{tpu_custom_call.1} parent=51 // loop_footer_branch
                %245 = sbr.rel target = $region54
              $region59: #{tpu_custom_call.1} parent=51 // loop_exit
                _
            $region52: #{tpu_custom_call.1} parent=47 // pred_fallthru
              _
            // Predicated region
            $region60: #{tpu_custom_call.1} parent=47 // pred_check
              _
            $region61: #{tpu_custom_call.1} parent=47 // pred_check_branch
              %270 = sbr.rel target = $region63
            $region62: #{tpu_custom_call.1} parent=47 // pred_region
              _
            $region63: #{tpu_custom_call.1} parent=47 // pred_fallthru
              _
          $region48: #{tpu_custom_call.1} parent=43 // pred_fallthru
            _
          %271 = vnop
        $region44: #{tpu_custom_call.1} parent=39 // pred_fallthru
          _
      $region40: #{tpu_custom_call.1} parent=5 // pred_fallthru
        _
      %p272 = scmp.le.s32.totalorder 1, %s16
      %p273 = scmp.lt.s32.totalorder %s16, 3
      %p274 = pnand %p272, %p273
      %p275 = pneg %p274
      // Predicated region
      $region64: #{tpu_custom_call.1} parent=5 // pred_check
        _
      $region65: #{tpu_custom_call.1} parent=5 // pred_check_branch
        %277 = sbr.rel (%p274) target = $region67
      $region66: #{tpu_custom_call.1} parent=5 // pred_region
        %s278 = ssub.s32 %s16, 1
        %s279 = sand.u32 %s29, 1
        %s280 = sand.u32 %s29, 1
        %s281 = smul.addr %s280, 64
        %s282 = scalar_lea.vmem [#allocation2], %s281
        // Predicated region
        $region68: #{tpu_custom_call.1} parent=66 // pred_check
          %p283 = pneg %p42
        $region69: #{tpu_custom_call.1} parent=66 // pred_check_branch
          %285 = sbr.rel (%p283) target = $region71
        $region70: #{tpu_custom_call.1} parent=66 // pred_region
          _
        $region71: #{tpu_custom_call.1} parent=66 // pred_fallthru
          _
        %s286 = sand.u32 %s29, 1
        %s287 = sand.u32 %s29, 1
        %s288 = smul.addr %s287, 64
        %s289 = scalar_lea.vmem [#allocation2], %s288
        %p290 = pneg %p42
        %p291 = pneg %p39
        %p292 = pneg %p63
        %p293 = pneg %p60
        %p294 = pneg %p84
        %p295 = pneg %p81
        %p296 = pneg %p105
        %p297 = pneg %p102
        %p298 = pneg %p126
        %p299 = pneg %p123
        %p300 = pneg %p147
        %p301 = pneg %p144
        %p302 = pneg %p168
        %p303 = pneg %p165
        %p304 = pneg %p194
        %p305 = pneg %p191
        %s306 = sand.u32 %s181, 1
        %s307 = scalar_lea.sflag [#allocation4], %s306
        %s308 = sand.u32 %s181, 1
        %s309 = smul.addr %s308, 64
        %s310 = scalar_lea.vmem [#allocation3], %s309
        %s311 = smul.u32 4, %s21
        %s312 = smul.u32 4, %s21
        %v313 = vld [vmem:[%s282] sm:$0xff]
        %v314 = vld [vmem:[%s282 + $0x8] sm:$0xff]
        %v315 = vld [vmem:[%s282 + $0x10] sm:$0xff]
        %v316 = vld [vmem:[%s282 + $0x18] sm:$0xff]
        %v317 = vld [vmem:[%s282 + $0x20] sm:$0xff]
        %v318 = vld [vmem:[%s282 + $0x28] sm:$0xff]
        %v319 = vld [vmem:[%s282 + $0x30] sm:$0xff]
        %v320 = vld [vmem:[%s282 + $0x38] sm:$0xff]
        %v321 = vld [vmem:[%s1] sm:$0xff]
        %v322 = vld [vmem:[%s1 + $0x8] sm:$0xff]
        %v323 = vld [vmem:[%s1 + $0x10] sm:$0xff]
        %v324 = vld [vmem:[%s1 + $0x18] sm:$0xff]
        %v325 = vld [vmem:[%s1 + $0x20] sm:$0xff]
        %v326 = vld [vmem:[%s1 + $0x28] sm:$0xff]
        %v327 = vld [vmem:[%s1 + $0x30] sm:$0xff]
        %v328 = vld [vmem:[%s1 + $0x38] sm:$0xff]
        %v329 = vld [vmem:[%s2] sm:$0xff]
        %v330 = vld [vmem:[%s2 + $0x8] sm:$0xff]
        %v331 = vld [vmem:[%s2 + $0x10] sm:$0xff]
        %v332 = vld [vmem:[%s2 + $0x18] sm:$0xff]
        %v333 = vld [vmem:[%s2 + $0x20] sm:$0xff]
        %v334 = vld [vmem:[%s2 + $0x28] sm:$0xff]
        %v335 = vld [vmem:[%s2 + $0x30] sm:$0xff]
        %v336 = vld [vmem:[%s2 + $0x38] sm:$0xff]
        %338 = vset.pattern.permute.xlu0 0
        %339 = vperm.xlu0 %338, %v329
        %v340 = vpop.permute.xlu0 %339
        %343 = vset.pattern.permute.xlu0 0
        %344 = vperm.xlu0 %343, %v330
        %v345 = vpop.permute.xlu0 %344
        %348 = vset.pattern.permute.xlu0 0
        %349 = vperm.xlu0 %348, %v331
        %v350 = vpop.permute.xlu0 %349
        %353 = vset.pattern.permute.xlu0 0
        %354 = vperm.xlu0 %353, %v332
        %v355 = vpop.permute.xlu0 %354
        %358 = vset.pattern.permute.xlu0 0
        %359 = vperm.xlu0 %358, %v333
        %v360 = vpop.permute.xlu0 %359
        %363 = vset.pattern.permute.xlu0 0
        %364 = vperm.xlu0 %363, %v334
        %v365 = vpop.permute.xlu0 %364
        %368 = vset.pattern.permute.xlu0 0
        %369 = vperm.xlu0 %368, %v335
        %v370 = vpop.permute.xlu0 %369
        %373 = vset.pattern.permute.xlu0 0
        %374 = vperm.xlu0 %373, %v336
        %v375 = vpop.permute.xlu0 %374
        %vm377 = vcmask 130048
        %v379 = vsel %vm377, %v321, 0
        %v382 = vsel %vm377, %v322, 0
        %v385 = vsel %vm377, %v323, 0
        %v388 = vsel %vm377, %v324, 0
        %v391 = vsel %vm377, %v325, 0
        %v394 = vsel %vm377, %v326, 0
        %v397 = vsel %vm377, %v327, 0
        %v400 = vsel %vm377, %v328, 0
        %402 = vmatprep.subr.mxu0 0.0
        %403 = vmatpush1.msra.mxu0 0.0
        %404 = vmatprep.subr.mxu0 0.0
        %405 = vmatpush1.msra.mxu0 0.0
        %406 = vmatprep.subr.mxu0 0.0
        %407 = vmatpush1.msra.mxu0 0.0
        %408 = vmatprep.subr.mxu0 0.0
        %409 = vmatpush1.msra.mxu0 0.0
        %410 = vmatprep.subr.mxu0 0.0
        %411 = vmatpush1.msra.mxu0 0.0
        %412 = vmatprep.subr.mxu0 0.0
        %413 = vmatpush1.msra.mxu0 0.0
        %414 = vmatprep.subr.mxu0 0.0
        %415 = vmatpush1.msra.mxu0 0.0
        %416 = vmatprep.subr.mxu0 0.0
        %417 = vmatpush1.msra.mxu0 0.0
        %418 = vmatprep.subr.mxu0 0.0
        %419 = vmatpush1.msra.mxu0 0.0
        %420 = vmatprep.subr.mxu0 0.0
        %421 = vmatpush1.msra.mxu0 0.0
        %422 = vmatprep.subr.mxu0 0.0
        %423 = vmatpush1.msra.mxu0 0.0
        %424 = vmatprep.subr.mxu0 0.0
        %425 = vmatpush1.msra.mxu0 0.0
        %426 = vmatprep.subr.mxu0 0.0
        %427 = vmatpush1.msra.mxu0 0.0
        %428 = vmatprep.subr.mxu0 0.0
        %429 = vmatpush1.msra.mxu0 0.0
        %430 = vmatprep.subr.mxu0 %v318
        %431 = vmatpush1.msra.mxu0 %v317
        %432 = vmatprep.subr.mxu0 %v314
        %433 = vmatpush1.msra.mxu0 %v313
        %434 = vmatprep.subr.mxu0 0.0
        %435 = vmatpush2.msra.mxu0 0.0
        %436 = vmatprep.subr.mxu0 0.0
        %437 = vmatpush2.msra.mxu0 0.0
        %438 = vmatprep.subr.mxu0 0.0
        %439 = vmatpush2.msra.mxu0 0.0
        %440 = vmatprep.subr.mxu0 0.0
        %441 = vmatpush2.msra.mxu0 0.0
        %442 = vmatprep.subr.mxu0 0.0
        %443 = vmatpush2.msra.mxu0 0.0
        %444 = vmatprep.subr.mxu0 0.0
        %445 = vmatpush2.msra.mxu0 0.0
        %446 = vmatprep.subr.mxu0 0.0
        %447 = vmatpush2.msra.mxu0 0.0
        %448 = vmatprep.subr.mxu0 0.0
        %449 = vmatpush2.msra.mxu0 0.0
        %450 = vmatprep.subr.mxu0 0.0
        %451 = vmatpush2.msra.mxu0 0.0
        %452 = vmatprep.subr.mxu0 0.0
        %453 = vmatpush2.msra.mxu0 0.0
        %454 = vmatprep.subr.mxu0 0.0
        %455 = vmatpush2.msra.mxu0 0.0
        %456 = vmatprep.subr.mxu0 0.0
        %457 = vmatpush2.msra.mxu0 0.0
        %458 = vmatprep.subr.mxu0 0.0
        %459 = vmatpush2.msra.mxu0 0.0
        %460 = vmatprep.subr.mxu0 0.0
        %461 = vmatpush2.msra.mxu0 0.0
        %462 = vmatprep.subr.mxu0 0.0
        %463 = vmatpush2.msra.mxu0 0.0
        %464 = vmatprep.subr.mxu0 0.0
        %465 = vmatpush2.msra.mxu0 0.0
        %466 = vmatprep.mubr.f32.mxu0 0.0
        %467 = vmatmul.mubr.f32.gmra.mxu0 %v379
        %v468 = vpop.f32.mrf.mxu0
        %v469 = vadd.f32 %v340, %v468
        %v470 = vpop.f32.mrf.mxu0
        %v471 = vadd.f32 %v340, %v470
        %472 = vmatprep.mubr.f32.mxu0 0.0
        %473 = vmatmul.mubr.f32.gmra.mxu0 %v382
        %v474 = vpop.f32.mrf.mxu0
        %v475 = vadd.f32 %v345, %v474
        %v476 = vpop.f32.mrf.mxu0
        %v477 = vadd.f32 %v345, %v476
        %478 = vmatprep.mubr.f32.mxu0 0.0
        %479 = vmatmul.mubr.f32.gmra.mxu0 %v385
        %v480 = vpop.f32.mrf.mxu0
        %v481 = vadd.f32 %v350, %v480
        %v482 = vpop.f32.mrf.mxu0
        %v483 = vadd.f32 %v350, %v482
        %484 = vmatprep.mubr.f32.mxu0 0.0
        %485 = vmatmul.mubr.f32.gmra.mxu0 %v388
        %v486 = vpop.f32.mrf.mxu0
        %v487 = vadd.f32 %v355, %v486
        %v488 = vpop.f32.mrf.mxu0
        %v489 = vadd.f32 %v355, %v488
        %490 = vmatprep.mubr.f32.mxu0 0.0
        %491 = vmatmul.mubr.f32.gmra.mxu0 %v391
        %v492 = vpop.f32.mrf.mxu0
        %v493 = vadd.f32 %v360, %v492
        %v494 = vpop.f32.mrf.mxu0
        %v495 = vadd.f32 %v360, %v494
        %496 = vmatprep.mubr.f32.mxu0 0.0
        %497 = vmatmul.mubr.f32.gmra.mxu0 %v394
        %v498 = vpop.f32.mrf.mxu0
        %v499 = vadd.f32 %v365, %v498
        %v500 = vpop.f32.mrf.mxu0
        %v501 = vadd.f32 %v365, %v500
        %502 = vmatprep.mubr.f32.mxu0 0.0
        %503 = vmatmul.mubr.f32.gmra.mxu0 %v397
        %v504 = vpop.f32.mrf.mxu0
        %v505 = vadd.f32 %v370, %v504
        %v506 = vpop.f32.mrf.mxu0
        %v507 = vadd.f32 %v370, %v506
        %508 = vmatprep.mubr.f32.mxu0 0.0
        %509 = vmatmul.mubr.f32.gmra.mxu0 %v400
        %v510 = vpop.f32.mrf.mxu0
        %v511 = vadd.f32 %v375, %v510
        %v512 = vpop.f32.mrf.mxu0
        %v513 = vadd.f32 %v375, %v512
        %514 = vdwg.mxu0
        %515 = vmatprep.subr.mxu0 0.0
        %516 = vmatpush1.msra.mxu0 0.0
        %517 = vmatprep.subr.mxu0 0.0
        %518 = vmatpush1.msra.mxu0 0.0
        %519 = vmatprep.subr.mxu0 0.0
        %520 = vmatpush1.msra.mxu0 0.0
        %521 = vmatprep.subr.mxu0 0.0
        %522 = vmatpush1.msra.mxu0 0.0
        %523 = vmatprep.subr.mxu0 0.0
        %524 = vmatpush1.msra.mxu0 0.0
        %525 = vmatprep.subr.mxu0 0.0
        %526 = vmatpush1.msra.mxu0 0.0
        %527 = vmatprep.subr.mxu0 0.0
        %528 = vmatpush1.msra.mxu0 0.0
        %529 = vmatprep.subr.mxu0 0.0
        %530 = vmatpush1.msra.mxu0 0.0
        %531 = vmatprep.subr.mxu0 0.0
        %532 = vmatpush1.msra.mxu0 0.0
        %533 = vmatprep.subr.mxu0 0.0
        %534 = vmatpush1.msra.mxu0 0.0
        %535 = vmatprep.subr.mxu0 0.0
        %536 = vmatpush1.msra.mxu0 0.0
        %537 = vmatprep.subr.mxu0 0.0
        %538 = vmatpush1.msra.mxu0 0.0
        %539 = vmatprep.subr.mxu0 0.0
        %540 = vmatpush1.msra.mxu0 0.0
        %541 = vmatprep.subr.mxu0 0.0
        %542 = vmatpush1.msra.mxu0 0.0
        %543 = vmatprep.subr.mxu0 %v320
        %544 = vmatpush1.msra.mxu0 %v319
        %545 = vmatprep.subr.mxu0 %v316
        %546 = vmatpush1.msra.mxu0 %v315
        %547 = vmatprep.subr.mxu0 0.0
        %548 = vmatpush2.msra.mxu0 0.0
        %549 = vmatprep.subr.mxu0 0.0
        %550 = vmatpush2.msra.mxu0 0.0
        %551 = vmatprep.subr.mxu0 0.0
        %552 = vmatpush2.msra.mxu0 0.0
        %553 = vmatprep.subr.mxu0 0.0
        %554 = vmatpush2.msra.mxu0 0.0
        %555 = vmatprep.subr.mxu0 0.0
        %556 = vmatpush2.msra.mxu0 0.0
        %557 = vmatprep.subr.mxu0 0.0
        %558 = vmatpush2.msra.mxu0 0.0
        %559 = vmatprep.subr.mxu0 0.0
        %560 = vmatpush2.msra.mxu0 0.0
        %561 = vmatprep.subr.mxu0 0.0
        %562 = vmatpush2.msra.mxu0 0.0
        %563 = vmatprep.subr.mxu0 0.0
        %564 = vmatpush2.msra.mxu0 0.0
        %565 = vmatprep.subr.mxu0 0.0
        %566 = vmatpush2.msra.mxu0 0.0
        %567 = vmatprep.subr.mxu0 0.0
        %568 = vmatpush2.msra.mxu0 0.0
        %569 = vmatprep.subr.mxu0 0.0
        %570 = vmatpush2.msra.mxu0 0.0
        %571 = vmatprep.subr.mxu0 0.0
        %572 = vmatpush2.msra.mxu0 0.0
        %573 = vmatprep.subr.mxu0 0.0
        %574 = vmatpush2.msra.mxu0 0.0
        %575 = vmatprep.subr.mxu0 0.0
        %576 = vmatpush2.msra.mxu0 0.0
        %577 = vmatprep.subr.mxu0 0.0
        %578 = vmatpush2.msra.mxu0 0.0
        %579 = vmatprep.mubr.f32.mxu0 0.0
        %580 = vmatmul.mubr.f32.gmra.mxu0 %v379
        %v581 = vpop.f32.mrf.mxu0
        %v582 = vadd.f32 %v340, %v581
        %v583 = vpop.f32.mrf.mxu0
        %v584 = vadd.f32 %v340, %v583
        %585 = vmatprep.mubr.f32.mxu0 0.0
        %586 = vmatmul.mubr.f32.gmra.mxu0 %v382
        %v587 = vpop.f32.mrf.mxu0
        %v588 = vadd.f32 %v345, %v587
        %v589 = vpop.f32.mrf.mxu0
        %v590 = vadd.f32 %v345, %v589
        %591 = vmatprep.mubr.f32.mxu0 0.0
        %592 = vmatmul.mubr.f32.gmra.mxu0 %v385
        %v593 = vpop.f32.mrf.mxu0
        %v594 = vadd.f32 %v350, %v593
        %v595 = vpop.f32.mrf.mxu0
        %v596 = vadd.f32 %v350, %v595
        %597 = vmatprep.mubr.f32.mxu0 0.0
        %598 = vmatmul.mubr.f32.gmra.mxu0 %v388
        %v599 = vpop.f32.mrf.mxu0
        %v600 = vadd.f32 %v355, %v599
        %v601 = vpop.f32.mrf.mxu0
        %v602 = vadd.f32 %v355, %v601
        %603 = vmatprep.mubr.f32.mxu0 0.0
        %604 = vmatmul.mubr.f32.gmra.mxu0 %v391
        %v605 = vpop.f32.mrf.mxu0
        %v606 = vadd.f32 %v360, %v605
        %v607 = vpop.f32.mrf.mxu0
        %v608 = vadd.f32 %v360, %v607
        %609 = vmatprep.mubr.f32.mxu0 0.0
        %610 = vmatmul.mubr.f32.gmra.mxu0 %v394
        %v611 = vpop.f32.mrf.mxu0
        %v612 = vadd.f32 %v365, %v611
        %v613 = vpop.f32.mrf.mxu0
        %v614 = vadd.f32 %v365, %v613
        %615 = vmatprep.mubr.f32.mxu0 0.0
        %616 = vmatmul.mubr.f32.gmra.mxu0 %v397
        %v617 = vpop.f32.mrf.mxu0
        %v618 = vadd.f32 %v370, %v617
        %v619 = vpop.f32.mrf.mxu0
        %v620 = vadd.f32 %v370, %v619
        %621 = vmatprep.mubr.f32.mxu0 0.0
        %622 = vmatmul.mubr.f32.gmra.mxu0 %v400
        %v623 = vpop.f32.mrf.mxu0
        %v624 = vadd.f32 %v375, %v623
        %v625 = vpop.f32.mrf.mxu0
        %v626 = vadd.f32 %v375, %v625
        %627 = vdwg.mxu0
        %v628 = vmax.f32 %v469, 0.0
        %v629 = vmax.f32 %v471, 0.0
        %v630 = vmax.f32 %v582, 0.0
        %v631 = vmax.f32 %v584, 0.0
        %v632 = vmax.f32 %v475, 0.0
        %v633 = vmax.f32 %v477, 0.0
        %v634 = vmax.f32 %v588, 0.0
        %v635 = vmax.f32 %v590, 0.0
        %v636 = vmax.f32 %v481, 0.0
        %v637 = vmax.f32 %v483, 0.0
        %v638 = vmax.f32 %v594, 0.0
        %v639 = vmax.f32 %v596, 0.0
        %v640 = vmax.f32 %v487, 0.0
        %v641 = vmax.f32 %v489, 0.0
        %v642 = vmax.f32 %v600, 0.0
        %v643 = vmax.f32 %v602, 0.0
        %v644 = vmax.f32 %v493, 0.0
        %v645 = vmax.f32 %v495, 0.0
        %v646 = vmax.f32 %v606, 0.0
        %v647 = vmax.f32 %v608, 0.0
        %v648 = vmax.f32 %v499, 0.0
        %v649 = vmax.f32 %v501, 0.0
        %v650 = vmax.f32 %v612, 0.0
        %v651 = vmax.f32 %v614, 0.0
        %v652 = vmax.f32 %v505, 0.0
        %v653 = vmax.f32 %v507, 0.0
        %v654 = vmax.f32 %v618, 0.0
        %v655 = vmax.f32 %v620, 0.0
        %v656 = vmax.f32 %v511, 0.0
        %v657 = vmax.f32 %v513, 0.0
        %v658 = vmax.f32 %v624, 0.0
        %v659 = vmax.f32 %v626, 0.0
        %v660 = vld [vmem:[%s3] sm:$0xff]
        %v661 = vld [vmem:[%s3 + $0x8] sm:$0xff]
        %v662 = vld [vmem:[%s3 + $0x10] sm:$0xff]
        %v663 = vld [vmem:[%s3 + $0x18] sm:$0xff]
        %v664 = vld [vmem:[%s3 + $0x20] sm:$0xff]
        %v665 = vld [vmem:[%s3 + $0x28] sm:$0xff]
        %v666 = vld [vmem:[%s3 + $0x30] sm:$0xff]
        %v667 = vld [vmem:[%s3 + $0x38] sm:$0xff]
        %v668 = vld [vmem:[%s4] sm:$0xff]
        %v669 = vld [vmem:[%s4 + $0x8] sm:$0xff]
        %v670 = vld [vmem:[%s4 + $0x10] sm:$0xff]
        %v671 = vld [vmem:[%s4 + $0x18] sm:$0xff]
        %v672 = vld [vmem:[%s4 + $0x20] sm:$0xff]
        %v673 = vld [vmem:[%s4 + $0x28] sm:$0xff]
        %v674 = vld [vmem:[%s4 + $0x30] sm:$0xff]
        %v675 = vld [vmem:[%s4 + $0x38] sm:$0xff]
        %677 = vset.pattern.permute.xlu0 0
        %678 = vperm.xlu0 %677, %v668
        %v679 = vpop.permute.xlu0 %678
        %682 = vset.pattern.permute.xlu0 0
        %683 = vperm.xlu0 %682, %v669
        %v684 = vpop.permute.xlu0 %683
        %687 = vset.pattern.permute.xlu0 0
        %688 = vperm.xlu0 %687, %v670
        %v689 = vpop.permute.xlu0 %688
        %692 = vset.pattern.permute.xlu0 0
        %693 = vperm.xlu0 %692, %v671
        %v694 = vpop.permute.xlu0 %693
        %697 = vset.pattern.permute.xlu0 0
        %698 = vperm.xlu0 %697, %v672
        %v699 = vpop.permute.xlu0 %698
        %702 = vset.pattern.permute.xlu0 0
        %703 = vperm.xlu0 %702, %v673
        %v704 = vpop.permute.xlu0 %703
        %707 = vset.pattern.permute.xlu0 0
        %708 = vperm.xlu0 %707, %v674
        %v709 = vpop.permute.xlu0 %708
        %712 = vset.pattern.permute.xlu0 0
        %713 = vperm.xlu0 %712, %v675
        %v714 = vpop.permute.xlu0 %713
        %vm716 = vcmask 523264
        %v718 = vsel %vm716, %v660, 0
        %v721 = vsel %vm716, %v661, 0
        %v724 = vsel %vm716, %v662, 0
        %v727 = vsel %vm716, %v663, 0
        %v730 = vsel %vm716, %v664, 0
        %v733 = vsel %vm716, %v665, 0
        %v736 = vsel %vm716, %v666, 0
        %v739 = vsel %vm716, %v667, 0
        %741 = vmatprep.subr.mxu0 0.0
        %742 = vmatpush1.msra.mxu0 0.0
        %743 = vmatprep.subr.mxu0 0.0
        %744 = vmatpush1.msra.mxu0 0.0
        %745 = vmatprep.subr.mxu0 0.0
        %746 = vmatpush1.msra.mxu0 0.0
        %747 = vmatprep.subr.mxu0 0.0
        %748 = vmatpush1.msra.mxu0 0.0
        %749 = vmatprep.subr.mxu0 0.0
        %750 = vmatpush1.msra.mxu0 0.0
        %751 = vmatprep.subr.mxu0 0.0
        %752 = vmatpush1.msra.mxu0 0.0
        %753 = vmatprep.subr.mxu0 0.0
        %754 = vmatpush1.msra.mxu0 0.0
        %755 = vmatprep.subr.mxu0 0.0
        %756 = vmatpush1.msra.mxu0 0.0
        %757 = vmatprep.subr.mxu0 %v657
        %758 = vmatpush1.msra.mxu0 %v656
        %759 = vmatprep.subr.mxu0 %v653
        %760 = vmatpush1.msra.mxu0 %v652
        %761 = vmatprep.subr.mxu0 %v649
        %762 = vmatpush1.msra.mxu0 %v648
        %763 = vmatprep.subr.mxu0 %v645
        %764 = vmatpush1.msra.mxu0 %v644
        %765 = vmatprep.subr.mxu0 %v641
        %766 = vmatpush1.msra.mxu0 %v640
        %767 = vmatprep.subr.mxu0 %v637
        %768 = vmatpush1.msra.mxu0 %v636
        %769 = vmatprep.subr.mxu0 %v633
        %770 = vmatpush1.msra.mxu0 %v632
        %771 = vmatprep.subr.mxu0 %v629
        %772 = vmatpush1.msra.mxu0 %v628
        %773 = vmatprep.subr.mxu0 0.0
        %774 = vmatpush2.msra.mxu0 0.0
        %775 = vmatprep.subr.mxu0 0.0
        %776 = vmatpush2.msra.mxu0 0.0
        %777 = vmatprep.subr.mxu0 0.0
        %778 = vmatpush2.msra.mxu0 0.0
        %779 = vmatprep.subr.mxu0 0.0
        %780 = vmatpush2.msra.mxu0 0.0
        %781 = vmatprep.subr.mxu0 0.0
        %782 = vmatpush2.msra.mxu0 0.0
        %783 = vmatprep.subr.mxu0 0.0
        %784 = vmatpush2.msra.mxu0 0.0
        %785 = vmatprep.subr.mxu0 0.0
        %786 = vmatpush2.msra.mxu0 0.0
        %787 = vmatprep.subr.mxu0 0.0
        %788 = vmatpush2.msra.mxu0 0.0
        %789 = vmatprep.subr.mxu0 0.0
        %790 = vmatpush2.msra.mxu0 0.0
        %791 = vmatprep.subr.mxu0 0.0
        %792 = vmatpush2.msra.mxu0 0.0
        %793 = vmatprep.subr.mxu0 0.0
        %794 = vmatpush2.msra.mxu0 0.0
        %795 = vmatprep.subr.mxu0 0.0
        %796 = vmatpush2.msra.mxu0 0.0
        %797 = vmatprep.subr.mxu0 0.0
        %798 = vmatpush2.msra.mxu0 0.0
        %799 = vmatprep.subr.mxu0 0.0
        %800 = vmatpush2.msra.mxu0 0.0
        %801 = vmatprep.subr.mxu0 0.0
        %802 = vmatpush2.msra.mxu0 0.0
        %803 = vmatprep.subr.mxu0 0.0
        %804 = vmatpush2.msra.mxu0 0.0
        %805 = vmatprep.mubr.f32.mxu0 0.0
        %806 = vmatmul.mubr.f32.gmra.mxu0 %v718
        %v807 = vpop.f32.mrf.mxu0
        %v808 = vadd.f32 %v679, %v807
        %v809 = vpop.f32.mrf.mxu0
        %v810 = vadd.f32 %v679, %v809
        %811 = vmatprep.mubr.f32.mxu0 0.0
        %812 = vmatmul.mubr.f32.gmra.mxu0 %v721
        %v813 = vpop.f32.mrf.mxu0
        %v814 = vadd.f32 %v684, %v813
        %v815 = vpop.f32.mrf.mxu0
        %v816 = vadd.f32 %v684, %v815
        %817 = vmatprep.mubr.f32.mxu0 0.0
        %818 = vmatmul.mubr.f32.gmra.mxu0 %v724
        %v819 = vpop.f32.mrf.mxu0
        %v820 = vadd.f32 %v689, %v819
        %v821 = vpop.f32.mrf.mxu0
        %v822 = vadd.f32 %v689, %v821
        %823 = vmatprep.mubr.f32.mxu0 0.0
        %824 = vmatmul.mubr.f32.gmra.mxu0 %v727
        %v825 = vpop.f32.mrf.mxu0
        %v826 = vadd.f32 %v694, %v825
        %v827 = vpop.f32.mrf.mxu0
        %v828 = vadd.f32 %v694, %v827
        %829 = vmatprep.mubr.f32.mxu0 0.0
        %830 = vmatmul.mubr.f32.gmra.mxu0 %v730
        %v831 = vpop.f32.mrf.mxu0
        %v832 = vadd.f32 %v699, %v831
        %v833 = vpop.f32.mrf.mxu0
        %v834 = vadd.f32 %v699, %v833
        %835 = vmatprep.mubr.f32.mxu0 0.0
        %836 = vmatmul.mubr.f32.gmra.mxu0 %v733
        %v837 = vpop.f32.mrf.mxu0
        %v838 = vadd.f32 %v704, %v837
        %v839 = vpop.f32.mrf.mxu0
        %v840 = vadd.f32 %v704, %v839
        %841 = vmatprep.mubr.f32.mxu0 0.0
        %842 = vmatmul.mubr.f32.gmra.mxu0 %v736
        %v843 = vpop.f32.mrf.mxu0
        %v844 = vadd.f32 %v709, %v843
        %v845 = vpop.f32.mrf.mxu0
        %v846 = vadd.f32 %v709, %v845
        %847 = vmatprep.mubr.f32.mxu0 0.0
        %848 = vmatmul.mubr.f32.gmra.mxu0 %v739
        %v849 = vpop.f32.mrf.mxu0
        %v850 = vadd.f32 %v714, %v849
        %v851 = vpop.f32.mrf.mxu0
        %v852 = vadd.f32 %v714, %v851
        %853 = vdwg.mxu0
        %854 = vmatprep.subr.mxu0 0.0
        %855 = vmatpush1.msra.mxu0 0.0
        %856 = vmatprep.subr.mxu0 0.0
        %857 = vmatpush1.msra.mxu0 0.0
        %858 = vmatprep.subr.mxu0 0.0
        %859 = vmatpush1.msra.mxu0 0.0
        %860 = vmatprep.subr.mxu0 0.0
        %861 = vmatpush1.msra.mxu0 0.0
        %862 = vmatprep.subr.mxu0 0.0
        %863 = vmatpush1.msra.mxu0 0.0
        %864 = vmatprep.subr.mxu0 0.0
        %865 = vmatpush1.msra.mxu0 0.0
        %866 = vmatprep.subr.mxu0 0.0
        %867 = vmatpush1.msra.mxu0 0.0
        %868 = vmatprep.subr.mxu0 0.0
        %869 = vmatpush1.msra.mxu0 0.0
        %870 = vmatprep.subr.mxu0 %v659
        %871 = vmatpush1.msra.mxu0 %v658
        %872 = vmatprep.subr.mxu0 %v655
        %873 = vmatpush1.msra.mxu0 %v654
        %874 = vmatprep.subr.mxu0 %v651
        %875 = vmatpush1.msra.mxu0 %v650
        %876 = vmatprep.subr.mxu0 %v647
        %877 = vmatpush1.msra.mxu0 %v646
        %878 = vmatprep.subr.mxu0 %v643
        %879 = vmatpush1.msra.mxu0 %v642
        %880 = vmatprep.subr.mxu0 %v639
        %881 = vmatpush1.msra.mxu0 %v638
        %882 = vmatprep.subr.mxu0 %v635
        %883 = vmatpush1.msra.mxu0 %v634
        %884 = vmatprep.subr.mxu0 %v631
        %885 = vmatpush1.msra.mxu0 %v630
        %886 = vmatprep.subr.mxu0 0.0
        %887 = vmatpush2.msra.mxu0 0.0
        %888 = vmatprep.subr.mxu0 0.0
        %889 = vmatpush2.msra.mxu0 0.0
        %890 = vmatprep.subr.mxu0 0.0
        %891 = vmatpush2.msra.mxu0 0.0
        %892 = vmatprep.subr.mxu0 0.0
        %893 = vmatpush2.msra.mxu0 0.0
        %894 = vmatprep.subr.mxu0 0.0
        %895 = vmatpush2.msra.mxu0 0.0
        %896 = vmatprep.subr.mxu0 0.0
        %897 = vmatpush2.msra.mxu0 0.0
        %898 = vmatprep.subr.mxu0 0.0
        %899 = vmatpush2.msra.mxu0 0.0
        %900 = vmatprep.subr.mxu0 0.0
        %901 = vmatpush2.msra.mxu0 0.0
        %902 = vmatprep.subr.mxu0 0.0
        %903 = vmatpush2.msra.mxu0 0.0
        %904 = vmatprep.subr.mxu0 0.0
        %905 = vmatpush2.msra.mxu0 0.0
        %906 = vmatprep.subr.mxu0 0.0
        %907 = vmatpush2.msra.mxu0 0.0
        %908 = vmatprep.subr.mxu0 0.0
        %909 = vmatpush2.msra.mxu0 0.0
        %910 = vmatprep.subr.mxu0 0.0
        %911 = vmatpush2.msra.mxu0 0.0
        %912 = vmatprep.subr.mxu0 0.0
        %913 = vmatpush2.msra.mxu0 0.0
        %914 = vmatprep.subr.mxu0 0.0
        %915 = vmatpush2.msra.mxu0 0.0
        %916 = vmatprep.subr.mxu0 0.0
        %917 = vmatpush2.msra.mxu0 0.0
        %918 = vmatprep.mubr.f32.mxu0 0.0
        %919 = vmatmul.mubr.f32.gmra.mxu0 %v718
        %v920 = vpop.f32.mrf.mxu0
        %v921 = vadd.f32 %v679, %v920
        %v922 = vpop.f32.mrf.mxu0
        %v923 = vadd.f32 %v679, %v922
        %924 = vmatprep.mubr.f32.mxu0 0.0
        %925 = vmatmul.mubr.f32.gmra.mxu0 %v721
        %v926 = vpop.f32.mrf.mxu0
        %v927 = vadd.f32 %v684, %v926
        %v928 = vpop.f32.mrf.mxu0
        %v929 = vadd.f32 %v684, %v928
        %930 = vmatprep.mubr.f32.mxu0 0.0
        %931 = vmatmul.mubr.f32.gmra.mxu0 %v724
        %v932 = vpop.f32.mrf.mxu0
        %v933 = vadd.f32 %v689, %v932
        %v934 = vpop.f32.mrf.mxu0
        %v935 = vadd.f32 %v689, %v934
        %936 = vmatprep.mubr.f32.mxu0 0.0
        %937 = vmatmul.mubr.f32.gmra.mxu0 %v727
        %v938 = vpop.f32.mrf.mxu0
        %v939 = vadd.f32 %v694, %v938
        %v940 = vpop.f32.mrf.mxu0
        %v941 = vadd.f32 %v694, %v940
        %942 = vmatprep.mubr.f32.mxu0 0.0
        %943 = vmatmul.mubr.f32.gmra.mxu0 %v730
        %v944 = vpop.f32.mrf.mxu0
        %v945 = vadd.f32 %v699, %v944
        %v946 = vpop.f32.mrf.mxu0
        %v947 = vadd.f32 %v699, %v946
        %948 = vmatprep.mubr.f32.mxu0 0.0
        %949 = vmatmul.mubr.f32.gmra.mxu0 %v733
        %v950 = vpop.f32.mrf.mxu0
        %v951 = vadd.f32 %v704, %v950
        %v952 = vpop.f32.mrf.mxu0
        %v953 = vadd.f32 %v704, %v952
        %954 = vmatprep.mubr.f32.mxu0 0.0
        %955 = vmatmul.mubr.f32.gmra.mxu0 %v736
        %v956 = vpop.f32.mrf.mxu0
        %v957 = vadd.f32 %v709, %v956
        %v958 = vpop.f32.mrf.mxu0
        %v959 = vadd.f32 %v709, %v958
        %960 = vmatprep.mubr.f32.mxu0 0.0
        %961 = vmatmul.mubr.f32.gmra.mxu0 %v739
        %v962 = vpop.f32.mrf.mxu0
        %v963 = vadd.f32 %v714, %v962
        %v964 = vpop.f32.mrf.mxu0
        %v965 = vadd.f32 %v714, %v964
        %966 = vdwg.mxu0
        %v967 = vmax.f32 %v808, 0.0
        %v968 = vmax.f32 %v810, 0.0
        %v969 = vmax.f32 %v921, 0.0
        %v970 = vmax.f32 %v923, 0.0
        %v971 = vmax.f32 %v814, 0.0
        %v972 = vmax.f32 %v816, 0.0
        %v973 = vmax.f32 %v927, 0.0
        %v974 = vmax.f32 %v929, 0.0
        %v975 = vmax.f32 %v820, 0.0
        %v976 = vmax.f32 %v822, 0.0
        %v977 = vmax.f32 %v933, 0.0
        %v978 = vmax.f32 %v935, 0.0
        %v979 = vmax.f32 %v826, 0.0
        %v980 = vmax.f32 %v828, 0.0
        %v981 = vmax.f32 %v939, 0.0
        %v982 = vmax.f32 %v941, 0.0
        %v983 = vmax.f32 %v832, 0.0
        %v984 = vmax.f32 %v834, 0.0
        %v985 = vmax.f32 %v945, 0.0
        %v986 = vmax.f32 %v947, 0.0
        %v987 = vmax.f32 %v838, 0.0
        %v988 = vmax.f32 %v840, 0.0
        %v989 = vmax.f32 %v951, 0.0
        %v990 = vmax.f32 %v953, 0.0
        %v991 = vmax.f32 %v844, 0.0
        %v992 = vmax.f32 %v846, 0.0
        %v993 = vmax.f32 %v957, 0.0
        %v994 = vmax.f32 %v959, 0.0
        %v995 = vmax.f32 %v850, 0.0
        %v996 = vmax.f32 %v852, 0.0
        %v997 = vmax.f32 %v963, 0.0
        %v998 = vmax.f32 %v965, 0.0
        %v999 = vld [vmem:[%s5] sm:$0xff]
        %v1000 = vld [vmem:[%s5 + $0x8] sm:$0xff]
        %v1001 = vld [vmem:[%s6] sm:$0xff]
        %v1002 = vld [vmem:[%s6 + $0x8] sm:$0xff]
        %1004 = vset.pattern.permute.xlu0 0
        %1005 = vperm.xlu0 %1004, %v1001
        %v1006 = vpop.permute.xlu0 %1005
        %1009 = vset.pattern.permute.xlu0 0
        %1010 = vperm.xlu0 %1009, %v1002
        %v1011 = vpop.permute.xlu0 %1010
        %v1014 = vsel %vm716, %v999, 0
        %v1017 = vsel %vm716, %v1000, 0
        %1019 = vmatprep.subr.mxu0 0.0
        %1020 = vmatpush1.msra.mxu0 0.0
        %1021 = vmatprep.subr.mxu0 0.0
        %1022 = vmatpush1.msra.mxu0 0.0
        %1023 = vmatprep.subr.mxu0 0.0
        %1024 = vmatpush1.msra.mxu0 0.0
        %1025 = vmatprep.subr.mxu0 0.0
        %1026 = vmatpush1.msra.mxu0 0.0
        %1027 = vmatprep.subr.mxu0 0.0
        %1028 = vmatpush1.msra.mxu0 0.0
        %1029 = vmatprep.subr.mxu0 0.0
        %1030 = vmatpush1.msra.mxu0 0.0
        %1031 = vmatprep.subr.mxu0 0.0
        %1032 = vmatpush1.msra.mxu0 0.0
        %1033 = vmatprep.subr.mxu0 0.0
        %1034 = vmatpush1.msra.mxu0 0.0
        %1035 = vmatprep.subr.mxu0 %v996
        %1036 = vmatpush1.msra.mxu0 %v995
        %1037 = vmatprep.subr.mxu0 %v992
        %1038 = vmatpush1.msra.mxu0 %v991
        %1039 = vmatprep.subr.mxu0 %v988
        %1040 = vmatpush1.msra.mxu0 %v987
        %1041 = vmatprep.subr.mxu0 %v984
        %1042 = vmatpush1.msra.mxu0 %v983
        %1043 = vmatprep.subr.mxu0 %v980
        %1044 = vmatpush1.msra.mxu0 %v979
        %1045 = vmatprep.subr.mxu0 %v976
        %1046 = vmatpush1.msra.mxu0 %v975
        %1047 = vmatprep.subr.mxu0 %v972
        %1048 = vmatpush1.msra.mxu0 %v971
        %1049 = vmatprep.subr.mxu0 %v968
        %1050 = vmatpush1.msra.mxu0 %v967
        %1051 = vmatprep.subr.mxu0 0.0
        %1052 = vmatpush2.msra.mxu0 0.0
        %1053 = vmatprep.subr.mxu0 0.0
        %1054 = vmatpush2.msra.mxu0 0.0
        %1055 = vmatprep.subr.mxu0 0.0
        %1056 = vmatpush2.msra.mxu0 0.0
        %1057 = vmatprep.subr.mxu0 0.0
        %1058 = vmatpush2.msra.mxu0 0.0
        %1059 = vmatprep.subr.mxu0 0.0
        %1060 = vmatpush2.msra.mxu0 0.0
        %1061 = vmatprep.subr.mxu0 0.0
        %1062 = vmatpush2.msra.mxu0 0.0
        %1063 = vmatprep.subr.mxu0 0.0
        %1064 = vmatpush2.msra.mxu0 0.0
        %1065 = vmatprep.subr.mxu0 0.0
        %1066 = vmatpush2.msra.mxu0 0.0
        %1067 = vmatprep.subr.mxu0 0.0
        %1068 = vmatpush2.msra.mxu0 0.0
        %1069 = vmatprep.subr.mxu0 0.0
        %1070 = vmatpush2.msra.mxu0 0.0
        %1071 = vmatprep.subr.mxu0 0.0
        %1072 = vmatpush2.msra.mxu0 0.0
        %1073 = vmatprep.subr.mxu0 0.0
        %1074 = vmatpush2.msra.mxu0 0.0
        %1075 = vmatprep.subr.mxu0 0.0
        %1076 = vmatpush2.msra.mxu0 0.0
        %1077 = vmatprep.subr.mxu0 0.0
        %1078 = vmatpush2.msra.mxu0 0.0
        %1079 = vmatprep.subr.mxu0 0.0
        %1080 = vmatpush2.msra.mxu0 0.0
        %1081 = vmatprep.subr.mxu0 0.0
        %1082 = vmatpush2.msra.mxu0 0.0
        %1083 = vmatprep.mubr.f32.mxu0 0.0
        %1084 = vmatmul.mubr.f32.gmra.mxu0 %v1014
        %v1085 = vpop.f32.mrf.mxu0
        %v1086 = vadd.f32 %v1006, %v1085
        %v1087 = vpop.f32.mrf.mxu0
        %v1088 = vadd.f32 %v1006, %v1087
        %1089 = vmatprep.mubr.f32.mxu0 0.0
        %1090 = vmatmul.mubr.f32.gmra.mxu0 %v1017
        %v1091 = vpop.f32.mrf.mxu0
        %v1092 = vadd.f32 %v1011, %v1091
        %v1093 = vpop.f32.mrf.mxu0
        %v1094 = vadd.f32 %v1011, %v1093
        %1095 = vdwg.mxu0
        %1096 = vmatprep.subr.mxu0 0.0
        %1097 = vmatpush1.msra.mxu0 0.0
        %1098 = vmatprep.subr.mxu0 0.0
        %1099 = vmatpush1.msra.mxu0 0.0
        %1100 = vmatprep.subr.mxu0 0.0
        %1101 = vmatpush1.msra.mxu0 0.0
        %1102 = vmatprep.subr.mxu0 0.0
        %1103 = vmatpush1.msra.mxu0 0.0
        %1104 = vmatprep.subr.mxu0 0.0
        %1105 = vmatpush1.msra.mxu0 0.0
        %1106 = vmatprep.subr.mxu0 0.0
        %1107 = vmatpush1.msra.mxu0 0.0
        %1108 = vmatprep.subr.mxu0 0.0
        %1109 = vmatpush1.msra.mxu0 0.0
        %1110 = vmatprep.subr.mxu0 0.0
        %1111 = vmatpush1.msra.mxu0 0.0
        %1112 = vmatprep.subr.mxu0 %v998
        %1113 = vmatpush1.msra.mxu0 %v997
        %1114 = vmatprep.subr.mxu0 %v994
        %1115 = vmatpush1.msra.mxu0 %v993
        %1116 = vmatprep.subr.mxu0 %v990
        %1117 = vmatpush1.msra.mxu0 %v989
        %1118 = vmatprep.subr.mxu0 %v986
        %1119 = vmatpush1.msra.mxu0 %v985
        %1120 = vmatprep.subr.mxu0 %v982
        %1121 = vmatpush1.msra.mxu0 %v981
        %1122 = vmatprep.subr.mxu0 %v978
        %1123 = vmatpush1.msra.mxu0 %v977
        %1124 = vmatprep.subr.mxu0 %v974
        %1125 = vmatpush1.msra.mxu0 %v973
        %1126 = vmatprep.subr.mxu0 %v970
        %1127 = vmatpush1.msra.mxu0 %v969
        %1128 = vmatprep.subr.mxu0 0.0
        %1129 = vmatpush2.msra.mxu0 0.0
        %1130 = vmatprep.subr.mxu0 0.0
        %1131 = vmatpush2.msra.mxu0 0.0
        %1132 = vmatprep.subr.mxu0 0.0
        %1133 = vmatpush2.msra.mxu0 0.0
        %1134 = vmatprep.subr.mxu0 0.0
        %1135 = vmatpush2.msra.mxu0 0.0
        %1136 = vmatprep.subr.mxu0 0.0
        %1137 = vmatpush2.msra.mxu0 0.0
        %1138 = vmatprep.subr.mxu0 0.0
        %1139 = vmatpush2.msra.mxu0 0.0
        %1140 = vmatprep.subr.mxu0 0.0
        %1141 = vmatpush2.msra.mxu0 0.0
        %1142 = vmatprep.subr.mxu0 0.0
        %1143 = vmatpush2.msra.mxu0 0.0
        %1144 = vmatprep.subr.mxu0 0.0
        %1145 = vmatpush2.msra.mxu0 0.0
        %1146 = vmatprep.subr.mxu0 0.0
        %1147 = vmatpush2.msra.mxu0 0.0
        %1148 = vmatprep.subr.mxu0 0.0
        %1149 = vmatpush2.msra.mxu0 0.0
        %1150 = vmatprep.subr.mxu0 0.0
        %1151 = vmatpush2.msra.mxu0 0.0
        %1152 = vmatprep.subr.mxu0 0.0
        %1153 = vmatpush2.msra.mxu0 0.0
        %1154 = vmatprep.subr.mxu0 0.0
        %1155 = vmatpush2.msra.mxu0 0.0
        %1156 = vmatprep.subr.mxu0 0.0
        %1157 = vmatpush2.msra.mxu0 0.0
        %1158 = vmatprep.subr.mxu0 0.0
        %1159 = vmatpush2.msra.mxu0 0.0
        %1160 = vmatprep.mubr.f32.mxu0 0.0
        %1161 = vmatmul.mubr.f32.gmra.mxu0 %v1014
        %v1162 = vpop.f32.mrf.mxu0
        %v1163 = vadd.f32 %v1006, %v1162
        %v1164 = vpop.f32.mrf.mxu0
        %v1165 = vadd.f32 %v1006, %v1164
        %1166 = vmatprep.mubr.f32.mxu0 0.0
        %1167 = vmatmul.mubr.f32.gmra.mxu0 %v1017
        %v1168 = vpop.f32.mrf.mxu0
        %v1169 = vadd.f32 %v1011, %v1168
        %v1170 = vpop.f32.mrf.mxu0
        %v1171 = vadd.f32 %v1011, %v1170
        %1172 = vdwg.mxu0
        %1173 = vst [vmem:[%s310] sm:$0xff] %v1086
        %1174 = vst [vmem:[%s310 + $0x8] sm:$0xff] %v1088
        %1175 = vst [vmem:[%s310 + $0x10] sm:$0xff] %v1163
        %1176 = vst [vmem:[%s310 + $0x18] sm:$0xff] %v1165
        %1177 = vst [vmem:[%s310 + $0x20] sm:$0xff] %v1092
        %1178 = vst [vmem:[%s310 + $0x28] sm:$0xff] %v1094
        %1179 = vst [vmem:[%s310 + $0x30] sm:$0xff] %v1169
        %1180 = vst [vmem:[%s310 + $0x38] sm:$0xff] %v1171
        %s1181 = sand.u32 %s181, 1
        %s1182 = scalar_lea.sflag [#allocation4], %s1181
        %s1183 = sand.u32 %s181, 1
        %s1184 = smul.addr %s1183, 64
        %s1185 = scalar_lea.vmem [#allocation3], %s1184
        // Predicated region
        $region72: #{tpu_custom_call.1} parent=66 // pred_check
          %p1186 = pneg %p191
        $region73: #{tpu_custom_call.1} parent=66 // pred_check_branch
          %1188 = sbr.rel (%p1186) target = $region75
        $region74: #{tpu_custom_call.1} parent=66 // pred_region
          %s1189 = smul.u32 4, %s21
          %s1191 = ssub.s32 1024, 1024
          %1192 = vsyncadd %s1182, %s1191
          %s1193 = smul.addr %s1189, 128
          %s1194 = scalar_lea.hbm %s7, %s1193
          %s1195 = sshll.u32 %s1185, 4
          %s1196 = int_to_ptr.vmem [resolvable:$true] %s1195
          %1201 = dma.vmem_to_hbm [thread:$0]  %s1196, 1024, %s1194, %s1182, 512, 1024, 32
        $region75: #{tpu_custom_call.1} parent=66 // pred_fallthru
          _
      $region67: #{tpu_custom_call.1} parent=5 // pred_fallthru
        _
      %p1202 = scmp.le.s32.totalorder 2, %s16
      // Predicated region
      $region76: #{tpu_custom_call.1} parent=5 // pred_check
        %p1203 = pneg %p1202
      $region77: #{tpu_custom_call.1} parent=5 // pred_check_branch
        %1205 = sbr.rel (%p1203) target = $region79
      $region78: #{tpu_custom_call.1} parent=5 // pred_region
        %s1206 = ssub.s32 %s16, 2
        // Predicated region
        $region80: #{tpu_custom_call.1} parent=78 // pred_check
          %p1207 = pneg %p197
        $region81: #{tpu_custom_call.1} parent=78 // pred_check_branch
          %1209 = sbr.rel (%p1207) target = $region83
        $region82: #{tpu_custom_call.1} parent=78 // pred_region
          %s1210 = sand.u32 %s182, 1
          %s1211 = scalar_lea.sflag [#allocation4], %s1210
          %s1212 = sand.u32 %s182, 1
          %s1213 = smul.addr %s1212, 64
          %s1214 = scalar_lea.vmem [#allocation3], %s1213
          %1215 = dma.done %s1211, 1024
        $region83: #{tpu_custom_call.1} parent=78 // pred_fallthru
          _
      $region79: #{tpu_custom_call.1} parent=5 // pred_fallthru
        _
    $region6: #{tpu_custom_call.1} parent=1 // loop_footer
      %s20 = sadd.s32 1, %s16
    $region7: #{tpu_custom_call.1} parent=1 // loop_footer_branch
      %15 = sbr.rel target = $region3
    $region8: #{tpu_custom_call.1} parent=1 // loop_exit
      _
    %1216 = vsyncpa [#allocation4], 1
    %s1217 = scalar_lea.sflag [#allocation4], 1
    %1218 = vsyncpa %s1217, 1

</llo_original>
